<compile_context>
chip_gen: v7x
topology: tpu7x:2x2x1
jax: 0.10.0
libtpu: 0.0.40
codegen_flags: <defaults>
</compile_context>

<pallas_src>
import functools

import jax
import jax.numpy as jnp
from jax.experimental import pallas as pl
from jax.experimental.pallas import tpu as pltpu


# ---------------------------------------------------------------------------
# Pass 1: per-channel batch statistics -> per-channel affine vectors.
# ---------------------------------------------------------------------------
def _stats_kernel(x_ref, gamma_ref, beta_ref,
                  scale_ref, shift_ref, inv_ref, nmi_ref,
                  acc_sum, acc_sq, *, eps, inv_count):
    ni = pl.program_id(1)
    hi = pl.program_id(2)

    @pl.when(jnp.logical_and(ni == 0, hi == 0))
    def _():
        acc_sum[...] = jnp.zeros_like(acc_sum)
        acc_sq[...] = jnp.zeros_like(acc_sq)

    # x block: (1, C_BLK, HW_BLK) -> (C_BLK, HW_BLK); channels on sublanes,
    # flattened spatial on lanes, so the per-channel reduction is a lane reduce.
    x = x_ref[0].astype(jnp.float32)
    acc_sum[...] += jnp.sum(x, axis=1, keepdims=True)
    acc_sq[...] += jnp.sum(x * x, axis=1, keepdims=True)

    is_last = jnp.logical_and(ni == pl.num_programs(1) - 1,
                              hi == pl.num_programs(2) - 1)

    @pl.when(is_last)
    def _():
        mean = acc_sum[...] * inv_count
        var = acc_sq[...] * inv_count - mean * mean          # biased variance
        var = jnp.maximum(var, 0.0)                          # guard fp cancellation
        inv_std = jax.lax.rsqrt(var + eps)
        gamma = gamma_ref[...].astype(jnp.float32)
        beta = beta_ref[...].astype(jnp.float32)
        scale = gamma * inv_std
        inv_ref[...] = inv_std
        nmi_ref[...] = -mean * inv_std
        scale_ref[...] = scale
        shift_ref[...] = beta - mean * scale


# ---------------------------------------------------------------------------
# Pass 2: apply normalization + affine as two per-channel FMAs.
# ---------------------------------------------------------------------------
def _apply_kernel(x_ref, scale_ref, shift_ref, inv_ref, nmi_ref, out_ref, bn_ref):
    x = x_ref[0].astype(jnp.float32)                         # (C_BLK, HW_BLK)
    out_ref[0] = (x * scale_ref[...] + shift_ref[...]).astype(out_ref.dtype)
    bn_ref[0] = (x * inv_ref[...] + nmi_ref[...]).astype(bn_ref.dtype)


# ---------------------------------------------------------------------------
# Tiling helpers.
# ---------------------------------------------------------------------------
def _pick_c_block(c):
    """Channel tile: multiple of 8 sublanes when possible, else full C."""
    if c % 8 != 0 or c <= 32:
        return c
    for cand in (32, 16, 8):
        if c % cand == 0:
            return cand
    return c


def _pick_hw_block(hw, c_blk):
    """HW tile: multiple of 128 lanes dividing HW, sized for a small VMEM footprint."""
    # Keep ~6 * c_blk * hw_blk * 4B (in + 2 outs, double-buffered) <= ~12 MiB.
    max_elems = max(128, (512 * 1024) // max(c_blk, 1))
    max_elems = max(128, (max_elems // 128) * 128)
    if hw <= max_elems:
        return hw
    best = None
    d = 128
    while d <= max_elems:
        if hw % d == 0:
            best = d
        d += 128
    return best if best is not None else hw


# ---------------------------------------------------------------------------
# Wrapper: native NCHW in / NCHW out (only free reshapes, no transposes).
# ---------------------------------------------------------------------------
def batch_norm_2d_mul(x_nchw, gamma, beta, eps=1e-5):
    """x_nchw: (N, C, H, W). gamma, beta: (C,). Returns (out, bn_out) in NCHW."""
    n, c, h, w = x_nchw.shape
    hw = h * w

    x3 = x_nchw.reshape(n, c, hw)                # free contiguous reshape
    gamma2 = gamma.reshape(c, 1).astype(jnp.float32)
    beta2 = beta.reshape(c, 1).astype(jnp.float32)

    c_blk = _pick_c_block(c)
    hw_blk = _pick_hw_block(hw, c_blk)
    c_tiles = c // c_blk
    hw_tiles = hw // hw_blk
    inv_count = 1.0 / float(n * hw)

    x_spec = pl.BlockSpec((1, c_blk, hw_blk), lambda ci, ni, hi: (ni, ci, hi))
    vec_spec = pl.BlockSpec((c_blk, 1), lambda ci, ni, hi: (ci, 0))
    stat_shape = jax.ShapeDtypeStruct((c, 1), jnp.float32)

    # Pass 1: per-channel scale / shift / inv_std / (-mean*inv_std).
    scale, shift, inv_std, nmi = pl.pallas_call(
        functools.partial(_stats_kernel, eps=eps, inv_count=inv_count),
        out_shape=(stat_shape, stat_shape, stat_shape, stat_shape),
        grid=(c_tiles, n, hw_tiles),
        in_specs=[x_spec, vec_spec, vec_spec],
        out_specs=(vec_spec, vec_spec, vec_spec, vec_spec),
        scratch_shapes=[
            pltpu.VMEM((c_blk, 1), jnp.float32),
            pltpu.VMEM((c_blk, 1), jnp.float32),
        ],
        compiler_params=pltpu.CompilerParams(
            dimension_semantics=("parallel", "arbitrary", "arbitrary")),
    )(x3, gamma2, beta2)

    # Pass 2: elementwise normalize + affine, fully parallel grid.
    out3, bn3 = pl.pallas_call(
        _apply_kernel,
        out_shape=(
            jax.ShapeDtypeStruct((n, c, hw), x_nchw.dtype),
            jax.ShapeDtypeStruct((n, c, hw), x_nchw.dtype),
        ),
        grid=(c_tiles, n, hw_tiles),
        in_specs=[x_spec, vec_spec, vec_spec, vec_spec, vec_spec],
        out_specs=(x_spec, x_spec),
        compiler_params=pltpu.CompilerParams(
            dimension_semantics=("parallel", "parallel", "parallel")),
    )(x3, scale, shift, inv_std, nmi)

    return out3.reshape(n, c, h, w), bn3.reshape(n, c, h, w)


# ---------------------------------------------------------------------------
# Pure-JAX reference (PyTorch training-mode semantics).
# ---------------------------------------------------------------------------
def _reference(x, gamma, beta, eps=1e-5):
    mean = jnp.mean(x, axis=(0, 2, 3), keepdims=True)
    var = jnp.mean((x - mean) ** 2, axis=(0, 2, 3), keepdims=True)
    bn = (x - mean) / jnp.sqrt(var + eps)
    out = gamma[None, :, None, None] * bn + beta[None, :, None, None]
    return out, bn


if __name__ == "__main__":
    key = jax.random.PRNGKey(0)
    N, C, H, W = 2, 4, 16, 16
    x = jax.random.normal(key, (N, C, H, W), dtype=jnp.float32) * 2.0 + 0.5

    # Deterministic parameter init matching the module's __init__:
    #   gamma = ones(num_features), beta = zeros(num_features)
    gamma = jnp.ones((C,), dtype=jnp.float32)
    beta = jnp.zeros((C,), dtype=jnp.float32)

    out, bn_out = batch_norm_2d_mul(x, gamma, beta, eps=1e-5)
    out = jax.block_until_ready(out)
    bn_out = jax.block_until_ready(bn_out)

    ref_out, ref_bn = _reference(x, gamma, beta, eps=1e-5)
    assert jnp.allclose(out, ref_out, atol=1e-4, rtol=1e-4)
    assert jnp.allclose(bn_out, ref_bn, atol=1e-4, rtol=1e-4)

    print("KERNEL_OK")
</pallas_src>

<mosaic_0001>
module attributes {stable_mosaic.version = 11 : i64} {
  func.func @_stats_kernel(%arg0: i32, %arg1: i32, %arg2: i32, %arg3: memref<1x4x256xf32, #tpu.memory_space<vmem>>, %arg4: memref<4x1xf32, #tpu.memory_space<vmem>>, %arg5: memref<4x1xf32, #tpu.memory_space<vmem>>, %arg6: memref<4x1xf32, #tpu.memory_space<vmem>>, %arg7: memref<4x1xf32, #tpu.memory_space<vmem>>, %arg8: memref<4x1xf32, #tpu.memory_space<vmem>>, %arg9: memref<4x1xf32, #tpu.memory_space<vmem>>, %arg10: memref<4x1xf32, #tpu.memory_space<vmem>>, %arg11: memref<4x1xf32, #tpu.memory_space<vmem>>) attributes {dimension_semantics = [#tpu.dimension_semantics<parallel>, #tpu.dimension_semantics<arbitrary>, #tpu.dimension_semantics<arbitrary>], iteration_bounds = array<i64: 1, 2, 1>, scalar_prefetch = 0 : i64, scratch_operands = 2 : i64, tpu.core_type = #tpu.core_type<tc>, window_params = [{transform_indices = @transform_0, window_bounds = array<i64: 1, 4, 256>}, {transform_indices = @transform_1, window_bounds = array<i64: 4, 1>}, {transform_indices = @transform_2, window_bounds = array<i64: 4, 1>}, {transform_indices = @transform_3, window_bounds = array<i64: 4, 1>}, {transform_indices = @transform_4, window_bounds = array<i64: 4, 1>}, {transform_indices = @transform_5, window_bounds = array<i64: 4, 1>}, {transform_indices = @transform_6, window_bounds = array<i64: 4, 1>}]} {
    %c0_i32 = arith.constant 0 : i32
    %0 = arith.cmpi eq, %arg1, %c0_i32 : i32
    %c0_i32_0 = arith.constant 0 : i32
    %1 = arith.cmpi eq, %arg2, %c0_i32_0 : i32
    %2 = arith.andi %0, %1 : i1
    %3 = arith.extui %2 : i1 to i32
    %c0_i32_1 = arith.constant 0 : i32
    %4 = arith.cmpi ne, %3, %c0_i32_1 : i32
    scf.if %4 {
      %cst_15 = arith.constant 0.000000e+00 : f32
      %23 = vector.broadcast %cst_15 : f32 to vector<4x1xf32>
      %c0_16 = arith.constant 0 : index
      %c0_17 = arith.constant 0 : index
      %24 = vector.load %arg10[%c0_16, %c0_17] : memref<4x1xf32, #tpu.memory_space<vmem>>, vector<4x1xf32>
      tpu.vector_store %arg10[%c0_16, %c0_17], %23 {strides = array<i32>} : memref<4x1xf32, #tpu.memory_space<vmem>>, vector<4x1xf32>,
      %cst_18 = arith.constant 0.000000e+00 : f32
      %25 = vector.broadcast %cst_18 : f32 to vector<4x1xf32>
      %c0_19 = arith.constant 0 : index
      %c0_20 = arith.constant 0 : index
      %26 = vector.load %arg11[%c0_19, %c0_20] : memref<4x1xf32, #tpu.memory_space<vmem>>, vector<4x1xf32>
      tpu.vector_store %arg11[%c0_19, %c0_20], %25 {strides = array<i32>} : memref<4x1xf32, #tpu.memory_space<vmem>>, vector<4x1xf32>,
    } else {
    }
    %c0 = arith.constant 0 : index
    %c0_2 = arith.constant 0 : index
    %c0_3 = arith.constant 0 : index
    %5 = vector.load %arg3[%c0, %c0_2, %c0_3] : memref<1x4x256xf32, #tpu.memory_space<vmem>>, vector<1x4x256xf32>
    %6 = vector.shape_cast %5 : vector<1x4x256xf32> to vector<4x256xf32>
    %c0_4 = arith.constant 0 : index
    %c0_5 = arith.constant 0 : index
    %7 = vector.load %arg10[%c0_4, %c0_5] : memref<4x1xf32, #tpu.memory_space<vmem>>, vector<4x1xf32>
    %cst = arith.constant dense<0.000000e+00> : vector<4xf32>
    %8 = vector.multi_reduction <add>, %6, %cst [1] : vector<4x256xf32> to vector<4xf32>
    %9 = vector.shape_cast %8 : vector<4xf32> to vector<4x1xf32>
    %10 = arith.addf %7, %9 : vector<4x1xf32>
    %c0_6 = arith.constant 0 : index
    %c0_7 = arith.constant 0 : index
    %11 = vector.load %arg10[%c0_6, %c0_7] : memref<4x1xf32, #tpu.memory_space<vmem>>, vector<4x1xf32>
    tpu.vector_store %arg10[%c0_6, %c0_7], %10 {strides = array<i32>} : memref<4x1xf32, #tpu.memory_space<vmem>>, vector<4x1xf32>,
    %c0_8 = arith.constant 0 : index
    %c0_9 = arith.constant 0 : index
    %12 = vector.load %arg11[%c0_8, %c0_9] : memref<4x1xf32, #tpu.memory_space<vmem>>, vector<4x1xf32>
    %13 = arith.mulf %6, %6 : vector<4x256xf32>
    %cst_10 = arith.constant dense<0.000000e+00> : vector<4xf32>
    %14 = vector.multi_reduction <add>, %13, %cst_10 [1] : vector<4x256xf32> to vector<4xf32>
    %15 = vector.shape_cast %14 : vector<4xf32> to vector<4x1xf32>
    %16 = arith.addf %12, %15 : vector<4x1xf32>
    %c0_11 = arith.constant 0 : index
    %c0_12 = arith.constant 0 : index
    %17 = vector.load %arg11[%c0_11, %c0_12] : memref<4x1xf32, #tpu.memory_space<vmem>>, vector<4x1xf32>
    tpu.vector_store %arg11[%c0_11, %c0_12], %16 {strides = array<i32>} : memref<4x1xf32, #tpu.memory_space<vmem>>, vector<4x1xf32>,
    %c1_i32 = arith.constant 1 : i32
    %18 = arith.cmpi eq, %arg1, %c1_i32 : i32
    %c0_i32_13 = arith.constant 0 : i32
    %19 = arith.cmpi eq, %arg2, %c0_i32_13 : i32
    %20 = arith.andi %18, %19 : i1
    %21 = arith.extui %20 : i1 to i32
    %c0_i32_14 = arith.constant 0 : i32
    %22 = arith.cmpi ne, %21, %c0_i32_14 : i32
    scf.if %22 {
      %c0_15 = arith.constant 0 : index
      %c0_16 = arith.constant 0 : index
      %23 = vector.load %arg10[%c0_15, %c0_16] : memref<4x1xf32, #tpu.memory_space<vmem>>, vector<4x1xf32>
      %cst_17 = arith.constant 0.001953125 : f32
      %24 = vector.broadcast %cst_17 : f32 to vector<4x1xf32>
      %25 = arith.mulf %23, %24 : vector<4x1xf32>
      %c0_18 = arith.constant 0 : index
      %c0_19 = arith.constant 0 : index
      %26 = vector.load %arg11[%c0_18, %c0_19] : memref<4x1xf32, #tpu.memory_space<vmem>>, vector<4x1xf32>
      %cst_20 = arith.constant 0.001953125 : f32
      %27 = vector.broadcast %cst_20 : f32 to vector<4x1xf32>
      %28 = arith.mulf %26, %27 : vector<4x1xf32>
      %29 = arith.mulf %25, %25 : vector<4x1xf32>
      %30 = arith.subf %28, %29 : vector<4x1xf32>
      %cst_21 = arith.constant 0.000000e+00 : f32
      %31 = vector.broadcast %cst_21 : f32 to vector<4x1xf32>
      %32 = arith.maximumf %30, %31 : vector<4x1xf32>
      %cst_22 = arith.constant 9.99999974E-6 : f32
      %33 = vector.broadcast %cst_22 : f32 to vector<4x1xf32>
      %34 = arith.addf %32, %33 : vector<4x1xf32>
      %35 = math.rsqrt %34 : vector<4x1xf32>
      %c0_23 = arith.constant 0 : index
      %c0_24 = arith.constant 0 : index
      %36 = vector.load %arg4[%c0_23, %c0_24] : memref<4x1xf32, #tpu.memory_space<vmem>>, vector<4x1xf32>
      %c0_25 = arith.constant 0 : index
      %c0_26 = arith.constant 0 : index
      %37 = vector.load %arg5[%c0_25, %c0_26] : memref<4x1xf32, #tpu.memory_space<vmem>>, vector<4x1xf32>
      %38 = arith.mulf %36, %35 : vector<4x1xf32>
      %c0_27 = arith.constant 0 : index
      %c0_28 = arith.constant 0 : index
      %39 = vector.load %arg8[%c0_27, %c0_28] : memref<4x1xf32, #tpu.memory_space<vmem>>, vector<4x1xf32>
      tpu.vector_store %arg8[%c0_27, %c0_28], %35 {strides = array<i32>} : memref<4x1xf32, #tpu.memory_space<vmem>>, vector<4x1xf32>,
      %cst_29 = arith.constant 0.000000e+00 : f32
      %40 = vector.broadcast %cst_29 : f32 to vector<4x1xf32>
      %41 = arith.subf %40, %25 : vector<4x1xf32>
      %42 = arith.mulf %41, %35 : vector<4x1xf32>
      %c0_30 = arith.constant 0 : index
      %c0_31 = arith.constant 0 : index
      %43 = vector.load %arg9[%c0_30, %c0_31] : memref<4x1xf32, #tpu.memory_space<vmem>>, vector<4x1xf32>
      tpu.vector_store %arg9[%c0_30, %c0_31], %42 {strides = array<i32>} : memref<4x1xf32, #tpu.memory_space<vmem>>, vector<4x1xf32>,
      %c0_32 = arith.constant 0 : index
      %c0_33 = arith.constant 0 : index
      %44 = vector.load %arg6[%c0_32, %c0_33] : memref<4x1xf32, #tpu.memory_space<vmem>>, vector<4x1xf32>
      tpu.vector_store %arg6[%c0_32, %c0_33], %38 {strides = array<i32>} : memref<4x1xf32, #tpu.memory_space<vmem>>, vector<4x1xf32>,
      %45 = arith.mulf %25, %38 : vector<4x1xf32>
      %46 = arith.subf %37, %45 : vector<4x1xf32>
      %c0_34 = arith.constant 0 : index
      %c0_35 = arith.constant 0 : index
      %47 = vector.load %arg7[%c0_34, %c0_35] : memref<4x1xf32, #tpu.memory_space<vmem>>, vector<4x1xf32>
      tpu.vector_store %arg7[%c0_34, %c0_35], %46 {strides = array<i32>} : memref<4x1xf32, #tpu.memory_space<vmem>>, vector<4x1xf32>,
    } else {
    }
    return
  }
  func.func @transform_0(%arg0: i32, %arg1: i32, %arg2: i32) -> (i32, i32, i32) {
    %c0_i32 = arith.constant 0 : i32
    return %arg1, %arg0, %arg2 : i32, i32, i32
  }
  func.func @transform_1(%arg0: i32, %arg1: i32, %arg2: i32) -> (i32, i32) {
    %c0_i32 = arith.constant 0 : i32
    %c0_i32_0 = arith.constant 0 : i32
    return %arg0, %c0_i32 : i32, i32
  }
  func.func @transform_2(%arg0: i32, %arg1: i32, %arg2: i32) -> (i32, i32) {
    %c0_i32 = arith.constant 0 : i32
    %c0_i32_0 = arith.constant 0 : i32
    return %arg0, %c0_i32 : i32, i32
  }
  func.func @transform_3(%arg0: i32, %arg1: i32, %arg2: i32) -> (i32, i32) {
    %c0_i32 = arith.constant 0 : i32
    %c0_i32_0 = arith.constant 0 : i32
    return %arg0, %c0_i32 : i32, i32
  }
  func.func @transform_4(%arg0: i32, %arg1: i32, %arg2: i32) -> (i32, i32) {
    %c0_i32 = arith.constant 0 : i32
    %c0_i32_0 = arith.constant 0 : i32
    return %arg0, %c0_i32 : i32, i32
  }
  func.func @transform_5(%arg0: i32, %arg1: i32, %arg2: i32) -> (i32, i32) {
    %c0_i32 = arith.constant 0 : i32
    %c0_i32_0 = arith.constant 0 : i32
    return %arg0, %c0_i32 : i32, i32
  }
  func.func @transform_6(%arg0: i32, %arg1: i32, %arg2: i32) -> (i32, i32) {
    %c0_i32 = arith.constant 0 : i32
    %c0_i32_0 = arith.constant 0 : i32
    return %arg0, %c0_i32 : i32, i32
  }
}

</mosaic_0001>

<llo_original>
// kernel: tpu_custom_call.1
$region0: #{tpu_custom_call.1}
  #allocation0 [shape = 'u32[]', space=smem, size = 0x4, offset = 0x4, fixed_abs, tag = 'smem constant byte address 0x4 - core index']
  #allocation1 [shape = 'u32[144,128]{1,0:T(1,128)}', space=vmem, size = 0x12000, scoped, tag = 'internal scratch']
  #allocation2 [shape = 'f32[4,1]{1,0:T(4,128)}', space=vmem, size = 0x800, scoped, tag = 'scratch operand']
  #allocation3 [shape = 'f32[4,1]{1,0:T(4,128)}', space=vmem, size = 0x800, scoped, tag = 'scratch operand']
  %s0 = inlined_call_operand.hbm [shape: f32[2,4,256], index: 0, kind: input, shape index: {}]
  %s1 = inlined_call_operand.vmem [shape: f32[4,1], index: 1, kind: input, shape index: {}]
  %s2 = inlined_call_operand.vmem [shape: f32[4,1], index: 2, kind: input, shape index: {}]
  %s3 = inlined_call_operand.vmem [shape: f32[4,1], index: 3, kind: output, shape index: {0}]
  %s4 = inlined_call_operand.vmem [shape: f32[4,1], index: 4, kind: output, shape index: {1}]
  %s5 = inlined_call_operand.vmem [shape: f32[4,1], index: 5, kind: output, shape index: {2}]
  %s6 = inlined_call_operand.vmem [shape: f32[4,1], index: 6, kind: output, shape index: {3}]
  %7 = xla_tuple %s3, %s4, %s5, %s6
  %s8 = sld [smem:[#allocation0]]
  $region81: #{tpu_custom_call.1} parent=0
    _
  %s10 = ssub.s32 1, %s8
  %s11 = scalar_select 0, %s10, %s8
  $region1: #{tpu_custom_call.1} parent=0
    #allocation4 [shape = 'u8[8192]{0}', space=vmem, size = 0x2000, scoped, tag = 'input window, operand 0']
    #allocation5 [shape = 's32[2]{0}', space=sflag, size = 0x8, scoped, tag = 'scoped memory for tpu_custom_call.1']
    %12 = vsyncpa [#allocation5], 0
    %s13 = scalar_lea.sflag [#allocation5], 1
    %14 = vsyncpa %s13, 0
    loop: start=0, step=1, limit=4
    $region2: #{tpu_custom_call.1} parent=1 // loop_pre_header
      _
    $region3: #{tpu_custom_call.1} parent=1 // loop_header
      %s16 = sphi 0, %s20
      %p17 = scmp.ge.s32.totalorder %s16, 4
      %s23 = sphi 0, %s42
      %s24 = sphi 0, %s38
      %s25 = sphi 0, %s34
      %s26 = sphi 0, %s23
      %s27 = sphi 0, %s24
      %s28 = sphi 0, %s25
      %s29 = sphi 0, %s26
      %s30 = sphi 0, %s27
      %s31 = sphi 0, %s28
      %s49 = sphi 0, %s51
      %s52 = sphi 0, %s49
      %s53 = sphi 0, %s52
      %s69 = sphi 0, %s53
      %s75 = sphi 0, %s77
      %s78 = sphi 0, %s75
      %s79 = sphi 0, %s78
      %s95 = sphi 0, %s79
      %s101 = sphi 0, %s103
      %s104 = sphi 0, %s101
      %s105 = sphi 0, %s104
      %s121 = sphi 0, %s105
      %s127 = sphi 0, %s129
      %s130 = sphi 0, %s127
      %s131 = sphi 0, %s130
      %s147 = sphi 0, %s131
      %s153 = sphi 0, %s155
      %s156 = sphi 0, %s153
      %s157 = sphi 0, %s156
      %s173 = sphi 0, %s157
      %s179 = sphi 0, %s181
      %s182 = sphi 0, %s179
      %s183 = sphi 0, %s182
      %s199 = sphi 0, %s183
      %s205 = sphi 0, %s207
      %s208 = sphi 0, %s205
      %s209 = sphi 0, %s208
      %s225 = sphi 0, %s209
    $region4: #{tpu_custom_call.1} parent=1 // loop_header_branch
      %19 = sbr.rel (%p17) target = $region8
    $region5: #{tpu_custom_call.1} parent=1 // loop_body
      %s21 = ssub.s32 %s16, 1
      %s22 = ssub.s32 %s16, 2
      %s32 = sadd.s32 1, %s25
      %p33 = scmp.ge.s32.totalorder %s32, 1
      %s34 = scalar_select %p33, 0, %s32
      %s35 = sadd.s32 1, %s24
      %s36 = scalar_select %p33, %s35, %s24
      %p37 = scmp.ge.s32.totalorder %s36, 2
      %s38 = scalar_select %p37, 0, %s36
      %s39 = sadd.s32 1, %s23
      %s40 = scalar_select %p37, %s39, %s23
      %p41 = scmp.ge.s32.totalorder %s40, 1
      %s42 = scalar_select %p41, 0, %s40
      %s43 = ssub.s32 %s24, %s38
      %s44 = ssub.s32 %s23, %s42
      %s45 = sor.u32 %s43, %s44
      %s46 = ssub.s32 %s25, %s34
      %s47 = sor.u32 %s45, %s46
      %p48 = scmp.eq.s32.totalorder %s47, 0
      %s50 = sadd.s32 %s49, 1
      %s51 = scalar_select %p48, %s49, %s50
      %p54 = pneg %p48
      %p55 = scmp.eq.s32.totalorder %s16, 1
      %p56 = por %p54, %p55
      %p57 = scmp.ne.s32.totalorder %s49, %s52
      %p58 = scmp.eq.s32.totalorder %s16, 0
      %p59 = por %p57, %p58
      %p60 = scmp.ne.s32.totalorder %s49, %s52
      %p61 = scmp.eq.s32.totalorder %s21, 1
      %p62 = por %p60, %p61
      %p63 = scmp.ne.s32.totalorder %s52, %s53
      %p64 = scmp.eq.s32.totalorder %s21, 0
      %p65 = por %p63, %p64
      %p66 = scmp.ne.s32.totalorder %s52, %s53
      %p67 = scmp.eq.s32.totalorder %s22, 1
      %p68 = por %p66, %p67
      %p70 = scmp.ne.s32.totalorder %s53, %s69
      %p71 = scmp.eq.s32.totalorder %s22, 0
      %p72 = por %p70, %p71
      %s73 = ssub.s32 %s23, %s42
      %p74 = scmp.eq.s32.totalorder %s73, 0
      %s76 = sadd.s32 %s75, 1
      %s77 = scalar_select %p74, %s75, %s76
      %p80 = pneg %p74
      %p81 = scmp.eq.s32.totalorder %s16, 1
      %p82 = por %p80, %p81
      %p83 = scmp.ne.s32.totalorder %s75, %s78
      %p84 = scmp.eq.s32.totalorder %s16, 0
      %p85 = por %p83, %p84
      %p86 = scmp.ne.s32.totalorder %s75, %s78
      %p87 = scmp.eq.s32.totalorder %s21, 1
      %p88 = por %p86, %p87
      %p89 = scmp.ne.s32.totalorder %s78, %s79
      %p90 = scmp.eq.s32.totalorder %s21, 0
      %p91 = por %p89, %p90
      %p92 = scmp.ne.s32.totalorder %s78, %s79
      %p93 = scmp.eq.s32.totalorder %s22, 1
      %p94 = por %p92, %p93
      %p96 = scmp.ne.s32.totalorder %s79, %s95
      %p97 = scmp.eq.s32.totalorder %s22, 0
      %p98 = por %p96, %p97
      %s99 = ssub.s32 %s23, %s42
      %p100 = scmp.eq.s32.totalorder %s99, 0
      %s102 = sadd.s32 %s101, 1
      %s103 = scalar_select %p100, %s101, %s102
      %p106 = pneg %p100
      %p107 = scmp.eq.s32.totalorder %s16, 1
      %p108 = por %p106, %p107
      %p109 = scmp.ne.s32.totalorder %s101, %s104
      %p110 = scmp.eq.s32.totalorder %s16, 0
      %p111 = por %p109, %p110
      %p112 = scmp.ne.s32.totalorder %s101, %s104
      %p113 = scmp.eq.s32.totalorder %s21, 1
      %p114 = por %p112, %p113
      %p115 = scmp.ne.s32.totalorder %s104, %s105
      %p116 = scmp.eq.s32.totalorder %s21, 0
      %p117 = por %p115, %p116
      %p118 = scmp.ne.s32.totalorder %s104, %s105
      %p119 = scmp.eq.s32.totalorder %s22, 1
      %p120 = por %p118, %p119
      %p122 = scmp.ne.s32.totalorder %s105, %s121
      %p123 = scmp.eq.s32.totalorder %s22, 0
      %p124 = por %p122, %p123
      %s125 = ssub.s32 %s23, %s42
      %p126 = scmp.eq.s32.totalorder %s125, 0
      %s128 = sadd.s32 %s127, 1
      %s129 = scalar_select %p126, %s127, %s128
      %p132 = pneg %p126
      %p133 = scmp.eq.s32.totalorder %s16, 1
      %p134 = por %p132, %p133
      %p135 = scmp.ne.s32.totalorder %s127, %s130
      %p136 = scmp.eq.s32.totalorder %s16, 0
      %p137 = por %p135, %p136
      %p138 = scmp.ne.s32.totalorder %s127, %s130
      %p139 = scmp.eq.s32.totalorder %s21, 1
      %p140 = por %p138, %p139
      %p141 = scmp.ne.s32.totalorder %s130, %s131
      %p142 = scmp.eq.s32.totalorder %s21, 0
      %p143 = por %p141, %p142
      %p144 = scmp.ne.s32.totalorder %s130, %s131
      %p145 = scmp.eq.s32.totalorder %s22, 1
      %p146 = por %p144, %p145
      %p148 = scmp.ne.s32.totalorder %s131, %s147
      %p149 = scmp.eq.s32.totalorder %s22, 0
      %p150 = por %p148, %p149
      %s151 = ssub.s32 %s23, %s42
      %p152 = scmp.eq.s32.totalorder %s151, 0
      %s154 = sadd.s32 %s153, 1
      %s155 = scalar_select %p152, %s153, %s154
      %p158 = pneg %p152
      %p159 = scmp.eq.s32.totalorder %s16, 1
      %p160 = por %p158, %p159
      %p161 = scmp.ne.s32.totalorder %s153, %s156
      %p162 = scmp.eq.s32.totalorder %s16, 0
      %p163 = por %p161, %p162
      %p164 = scmp.ne.s32.totalorder %s153, %s156
      %p165 = scmp.eq.s32.totalorder %s21, 1
      %p166 = por %p164, %p165
      %p167 = scmp.ne.s32.totalorder %s156, %s157
      %p168 = scmp.eq.s32.totalorder %s21, 0
      %p169 = por %p167, %p168
      %p170 = scmp.ne.s32.totalorder %s156, %s157
      %p171 = scmp.eq.s32.totalorder %s22, 1
      %p172 = por %p170, %p171
      %p174 = scmp.ne.s32.totalorder %s157, %s173
      %p175 = scmp.eq.s32.totalorder %s22, 0
      %p176 = por %p174, %p175
      %s177 = ssub.s32 %s23, %s42
      %p178 = scmp.eq.s32.totalorder %s177, 0
      %s180 = sadd.s32 %s179, 1
      %s181 = scalar_select %p178, %s179, %s180
      %p184 = pneg %p178
      %p185 = scmp.eq.s32.totalorder %s16, 1
      %p186 = por %p184, %p185
      %p187 = scmp.ne.s32.totalorder %s179, %s182
      %p188 = scmp.eq.s32.totalorder %s16, 0
      %p189 = por %p187, %p188
      %p190 = scmp.ne.s32.totalorder %s179, %s182
      %p191 = scmp.eq.s32.totalorder %s21, 1
      %p192 = por %p190, %p191
      %p193 = scmp.ne.s32.totalorder %s182, %s183
      %p194 = scmp.eq.s32.totalorder %s21, 0
      %p195 = por %p193, %p194
      %p196 = scmp.ne.s32.totalorder %s182, %s183
      %p197 = scmp.eq.s32.totalorder %s22, 1
      %p198 = por %p196, %p197
      %p200 = scmp.ne.s32.totalorder %s183, %s199
      %p201 = scmp.eq.s32.totalorder %s22, 0
      %p202 = por %p200, %p201
      %s203 = ssub.s32 %s23, %s42
      %p204 = scmp.eq.s32.totalorder %s203, 0
      %s206 = sadd.s32 %s205, 1
      %s207 = scalar_select %p204, %s205, %s206
      %p210 = pneg %p204
      %p211 = scmp.eq.s32.totalorder %s16, 1
      %p212 = por %p210, %p211
      %p213 = scmp.ne.s32.totalorder %s205, %s208
      %p214 = scmp.eq.s32.totalorder %s16, 0
      %p215 = por %p213, %p214
      %p216 = scmp.ne.s32.totalorder %s205, %s208
      %p217 = scmp.eq.s32.totalorder %s21, 1
      %p218 = por %p216, %p217
      %p219 = scmp.ne.s32.totalorder %s208, %s209
      %p220 = scmp.eq.s32.totalorder %s21, 0
      %p221 = por %p219, %p220
      %p222 = scmp.ne.s32.totalorder %s208, %s209
      %p223 = scmp.eq.s32.totalorder %s22, 1
      %p224 = por %p222, %p223
      %p226 = scmp.ne.s32.totalorder %s209, %s225
      %p227 = scmp.eq.s32.totalorder %s22, 0
      %p228 = por %p226, %p227
      %p229 = scmp.le.s32.totalorder 1, %s16
      %p230 = scmp.lt.s32.totalorder %s16, 3
      %p231 = pnand %p229, %p230
      %p232 = pneg %p231
      // Predicated region
      $region9: #{tpu_custom_call.1} parent=5 // pred_check
        _
      $region10: #{tpu_custom_call.1} parent=5 // pred_check_branch
        %234 = sbr.rel (%p231) target = $region12
      $region11: #{tpu_custom_call.1} parent=5 // pred_region
        %s235 = ssub.s32 %s16, 1
        // Predicated region
        $region13: #{tpu_custom_call.1} parent=11 // pred_check
          %p236 = pneg %p91
        $region14: #{tpu_custom_call.1} parent=11 // pred_check_branch
          %238 = sbr.rel (%p236) target = $region16
        $region15: #{tpu_custom_call.1} parent=11 // pred_region
          %p239 = scmp.lt.s32.totalorder %s26, 0
          %s240 = scalar_select %p239, %s26, 0
          %s241 = smul.addr %s240, 4
          %s242 = scalar_lea.vmem %s1, %s241
        $region16: #{tpu_custom_call.1} parent=11 // pred_fallthru
          _
        // Predicated region
        $region17: #{tpu_custom_call.1} parent=11 // pred_check
          %p243 = pneg %p117
        $region18: #{tpu_custom_call.1} parent=11 // pred_check_branch
          %245 = sbr.rel (%p243) target = $region20
        $region19: #{tpu_custom_call.1} parent=11 // pred_region
          %p246 = scmp.lt.s32.totalorder %s26, 0
          %s247 = scalar_select %p246, %s26, 0
          %s248 = smul.addr %s247, 4
          %s249 = scalar_lea.vmem %s2, %s248
        $region20: #{tpu_custom_call.1} parent=11 // pred_fallthru
          _
      $region12: #{tpu_custom_call.1} parent=5 // pred_fallthru
        _
      %p250 = scmp.lt.s32.totalorder %s16, 2
      // Predicated region
      $region21: #{tpu_custom_call.1} parent=5 // pred_check
        %p251 = pneg %p250
      $region22: #{tpu_custom_call.1} parent=5 // pred_check_branch
        %253 = sbr.rel (%p251) target = $region24
      $region23: #{tpu_custom_call.1} parent=5 // pred_region
        // Predicated region
        $region25: #{tpu_custom_call.1} parent=23 // pred_check
          %p254 = pneg %p59
        $region26: #{tpu_custom_call.1} parent=23 // pred_check_branch
          %256 = sbr.rel (%p254) target = $region28
        $region27: #{tpu_custom_call.1} parent=23 // pred_region
          %s257 = sand.u32 %s49, 1
          %s258 = scalar_lea.sflag [#allocation5], %s257
          %s259 = sand.u32 %s49, 1
          %s260 = smul.addr %s259, 8
          %s261 = scalar_lea.vmem [#allocation4], %s260
          %s262 = smul.u32 2, %s25
          %s264 = ssub.s32 128, 128
          %265 = vsyncadd %s258, %s264
          %s266 = smul.addr %s23, 2
          %s267 = sadd.s32 %s262, %s266
          %s268 = smul.addr %s24, 2
          %s269 = sadd.s32 %s267, %s268
          %s270 = smul.addr %s269, 64
          %s271 = scalar_lea.hbm %s0, %s270
          %s273 = sshll.u32 %s261, 4
          %s274 = int_to_ptr.vmem [resolvable:$true] %s273
          %276 = dma.hbm_to_vmem [thread:$0]  %s271, 128, %s274, %s258
        $region28: #{tpu_custom_call.1} parent=23 // pred_fallthru
          _
      $region24: #{tpu_custom_call.1} parent=5 // pred_fallthru
        _
      %p277 = scmp.le.s32.totalorder 1, %s16
      %p278 = scmp.lt.s32.totalorder %s16, 3
      %p279 = pnand %p277, %p278
      %p280 = pneg %p279
      // Predicated region
      $region29: #{tpu_custom_call.1} parent=5 // pred_check
        _
      $region30: #{tpu_custom_call.1} parent=5 // pred_check_branch
        %282 = sbr.rel (%p279) target = $region32
      $region31: #{tpu_custom_call.1} parent=5 // pred_region
        %s283 = ssub.s32 %s16, 1
        %s284 = sand.u32 %s52, 1
        %s285 = scalar_lea.sflag [#allocation5], %s284
        %s286 = sand.u32 %s52, 1
        %s287 = smul.addr %s286, 8
        %s288 = scalar_lea.vmem [#allocation4], %s287
        // Predicated region
        $region33: #{tpu_custom_call.1} parent=31 // pred_check
          %p289 = pneg %p65
        $region34: #{tpu_custom_call.1} parent=31 // pred_check_branch
          %291 = sbr.rel (%p289) target = $region36
        $region35: #{tpu_custom_call.1} parent=31 // pred_region
          %292 = dma.done %s285, 128
        $region36: #{tpu_custom_call.1} parent=31 // pred_fallthru
          _
        %s293 = sand.u32 %s52, 1
        %s294 = scalar_lea.sflag [#allocation5], %s293
        %s295 = sand.u32 %s52, 1
        %s296 = smul.addr %s295, 8
        %s297 = scalar_lea.vmem [#allocation4], %s296
        %p298 = pneg %p65
        %p299 = pneg %p62
        %p300 = scmp.lt.s32.totalorder %s26, 0
        %s301 = scalar_select %p300, %s26, 0
        %s302 = smul.addr %s301, 4
        %s303 = scalar_lea.vmem %s1, %s302
        %p304 = pneg %p91
        %p305 = pneg %p88
        %p306 = scmp.lt.s32.totalorder %s26, 0
        %s307 = scalar_select %p306, %s26, 0
        %s308 = smul.addr %s307, 4
        %s309 = scalar_lea.vmem %s2, %s308
        %p310 = pneg %p117
        %p311 = pneg %p114
        %p312 = pneg %p143
        %p313 = pneg %p140
        %p314 = scmp.lt.s32.totalorder %s26, 0
        %s315 = scalar_select %p314, %s26, 0
        %s316 = smul.addr %s315, 4
        %s317 = scalar_lea.vmem %s3, %s316
        %p318 = pneg %p169
        %p319 = pneg %p166
        %p320 = scmp.lt.s32.totalorder %s26, 0
        %s321 = scalar_select %p320, %s26, 0
        %s322 = smul.addr %s321, 4
        %s323 = scalar_lea.vmem %s4, %s322
        %p324 = pneg %p195
        %p325 = pneg %p192
        %p326 = scmp.lt.s32.totalorder %s26, 0
        %s327 = scalar_select %p326, %s26, 0
        %s328 = smul.addr %s327, 4
        %s329 = scalar_lea.vmem %s5, %s328
        %p330 = pneg %p221
        %p331 = pneg %p218
        %p332 = scmp.lt.s32.totalorder %s26, 0
        %s333 = scalar_select %p332, %s26, 0
        %s334 = smul.addr %s333, 4
        %s335 = scalar_lea.vmem %s6, %s334
        %s336 = smul.u32 2, %s28
        %p337 = scmp.lt.s32.totalorder %s26, 0
        %s338 = scalar_select %p337, %s26, 0
        %s339 = smul.addr %s338, 4
        %s340 = scalar_lea.vmem %s1, %s339
        %p341 = scmp.lt.s32.totalorder %s26, 0
        %s342 = scalar_select %p341, %s26, 0
        %s343 = smul.addr %s342, 4
        %s344 = scalar_lea.vmem %s2, %s343
        %p345 = scmp.lt.s32.totalorder %s26, 0
        %s346 = scalar_select %p345, %s26, 0
        %s347 = smul.addr %s346, 4
        %s348 = scalar_lea.vmem %s3, %s347
        %p349 = scmp.lt.s32.totalorder %s26, 0
        %s350 = scalar_select %p349, %s26, 0
        %s351 = smul.addr %s350, 4
        %s352 = scalar_lea.vmem %s4, %s351
        %p353 = scmp.lt.s32.totalorder %s26, 0
        %s354 = scalar_select %p353, %s26, 0
        %s355 = smul.addr %s354, 4
        %s356 = scalar_lea.vmem %s5, %s355
        %p357 = scmp.lt.s32.totalorder %s26, 0
        %s358 = scalar_select %p357, %s26, 0
        %s359 = smul.addr %s358, 4
        %s360 = scalar_lea.vmem %s6, %s359
        %p361 = scmp.eq.s32.totalorder %s27, 0
        %p362 = scmp.eq.s32.totalorder %s28, 0
        %p363 = pnand %p361, %p362
        %p364 = pneg %p363
        // Predicated region
        $region37: #{tpu_custom_call.1} parent=31 // pred_check
          _
        $region38: #{tpu_custom_call.1} parent=31 // pred_check_branch
          %366 = sbr.rel (%p363) target = $region40
        $region39: #{tpu_custom_call.1} parent=31 // pred_region
          %vm367 = vcmask 3072
          %368 = vst.msk [vmem:[#allocation2] sm:$0xf] %vm367, 0.0
          %369 = vst.msk [vmem:[#allocation3] sm:$0xf] %vm367, 0.0
        $region40: #{tpu_custom_call.1} parent=31 // pred_fallthru
          _
        %v370 = vld [vmem:[%s288] sm:$0xff]
        %v371 = vld [vmem:[#allocation2] sm:$0xf]
        %v373 = vcombine.high %v370, %v370
        %vm375 = vcmask 1043456
        %v376 = vsel %vm375, %v370, 0.0
        %v377 = vsel %vm375, %v373, 0.0
        %v378 = vadd.f32 %v376, %v377
        %379 = vadd.xlane.f32.xlu0 %v378
        %v380 = vpop.xlane.xlu0 %379
        %v381 = vadd.f32 %v371, %v380
        %vm382 = vcmask 3072
        %383 = vst.msk [vmem:[#allocation2] sm:$0xf] %vm382, %v381
        %v384 = vld [vmem:[#allocation3] sm:$0xf]
        %v385 = vmul.f32 %v370, %v370
        %v387 = vcombine.high %v385, %v385
        %v389 = vsel %vm375, %v385, 0.0
        %v390 = vsel %vm375, %v387, 0.0
        %v391 = vadd.f32 %v389, %v390
        %392 = vadd.xlane.f32.xlu0 %v391
        %v393 = vpop.xlane.xlu0 %392
        %v394 = vadd.f32 %v384, %v393
        %395 = vst.msk [vmem:[#allocation3] sm:$0xf] %vm382, %v394
        %p396 = scmp.eq.s32.totalorder %s27, 1
        %p397 = pnand %p396, %p362
        %p398 = pneg %p397
        // Predicated region
        $region41: #{tpu_custom_call.1} parent=31 // pred_check
          _
        $region42: #{tpu_custom_call.1} parent=31 // pred_check_branch
          %400 = sbr.rel (%p397) target = $region44
        $region43: #{tpu_custom_call.1} parent=31 // pred_region
          %v401 = vld [vmem:[#allocation2] sm:$0xf]
          %v402 = vmul.f32 %v401, 0.001953125
          %v403 = vld [vmem:[#allocation3] sm:$0xf]
          %v404 = vmul.f32 %v403, 0.001953125
          %v405 = vmul.f32 %v402, %v402
          %v406 = vsub.f32 %v404, %v405
          %v407 = vmax.f32 %v406, 0.0
          %v408 = vadd.f32 %v407, 1e-05
          %v409 = vrsqrt.pop %v408
          %v410 = vld [vmem:[%s340] sm:$0xf]
          %v411 = vld [vmem:[%s344] sm:$0xf]
          %v412 = vmul.f32 %v410, %v409
          %413 = vst.msk [vmem:[%s356] sm:$0xf] %vm382, %v409
          %v414 = vsub.f32 0.0, %v402
          %v415 = vmul.f32 %v414, %v409
          %416 = vst.msk [vmem:[%s360] sm:$0xf] %vm382, %v415
          %417 = vst.msk [vmem:[%s348] sm:$0xf] %vm382, %v412
          %v418 = vmul.f32 %v402, %v412
          %v419 = vsub.f32 %v411, %v418
          %420 = vst.msk [vmem:[%s352] sm:$0xf] %vm382, %v419
        $region44: #{tpu_custom_call.1} parent=31 // pred_fallthru
          _
        %p421 = scmp.lt.s32.totalorder %s26, 0
        %s422 = scalar_select %p421, %s26, 0
        %s423 = smul.addr %s422, 4
        %s424 = scalar_lea.vmem %s3, %s423
        %p425 = scmp.lt.s32.totalorder %s26, 0
        %s426 = scalar_select %p425, %s26, 0
        %s427 = smul.addr %s426, 4
        %s428 = scalar_lea.vmem %s4, %s427
        %p429 = scmp.lt.s32.totalorder %s26, 0
        %s430 = scalar_select %p429, %s26, 0
        %s431 = smul.addr %s430, 4
        %s432 = scalar_lea.vmem %s5, %s431
        %p433 = scmp.lt.s32.totalorder %s26, 0
        %s434 = scalar_select %p433, %s26, 0
        %s435 = smul.addr %s434, 4
        %s436 = scalar_lea.vmem %s6, %s435
        // Predicated region
        $region45: #{tpu_custom_call.1} parent=31 // pred_check
          %p437 = pneg %p140
        $region46: #{tpu_custom_call.1} parent=31 // pred_check_branch
          %439 = sbr.rel (%p437) target = $region48
        $region47: #{tpu_custom_call.1} parent=31 // pred_region
          _
        $region48: #{tpu_custom_call.1} parent=31 // pred_fallthru
          _
        // Predicated region
        $region49: #{tpu_custom_call.1} parent=31 // pred_check
          %p440 = pneg %p166
        $region50: #{tpu_custom_call.1} parent=31 // pred_check_branch
          %442 = sbr.rel (%p440) target = $region52
        $region51: #{tpu_custom_call.1} parent=31 // pred_region
          _
        $region52: #{tpu_custom_call.1} parent=31 // pred_fallthru
          _
        // Predicated region
        $region53: #{tpu_custom_call.1} parent=31 // pred_check
          %p443 = pneg %p192
        $region54: #{tpu_custom_call.1} parent=31 // pred_check_branch
          %445 = sbr.rel (%p443) target = $region56
        $region55: #{tpu_custom_call.1} parent=31 // pred_region
          _
        $region56: #{tpu_custom_call.1} parent=31 // pred_fallthru
          _
        // Predicated region
        $region57: #{tpu_custom_call.1} parent=31 // pred_check
          %p446 = pneg %p218
        $region58: #{tpu_custom_call.1} parent=31 // pred_check_branch
          %448 = sbr.rel (%p446) target = $region60
        $region59: #{tpu_custom_call.1} parent=31 // pred_region
          _
        $region60: #{tpu_custom_call.1} parent=31 // pred_fallthru
          _
        // Predicated region
        $region61: #{tpu_custom_call.1} parent=31 // pred_check
          %p449 = pneg %p140
        $region62: #{tpu_custom_call.1} parent=31 // pred_check_branch
          %451 = sbr.rel (%p449) target = $region64
        $region63: #{tpu_custom_call.1} parent=31 // pred_region
          %p452 = scmp.lt.s32.totalorder %s26, 0
          %s453 = scalar_select %p452, %s26, 0
          %s454 = smul.addr %s453, 4
          %s455 = scalar_lea.vmem %s3, %s454
        $region64: #{tpu_custom_call.1} parent=31 // pred_fallthru
          _
        // Predicated region
        $region65: #{tpu_custom_call.1} parent=31 // pred_check
          %p456 = pneg %p166
        $region66: #{tpu_custom_call.1} parent=31 // pred_check_branch
          %458 = sbr.rel (%p456) target = $region68
        $region67: #{tpu_custom_call.1} parent=31 // pred_region
          %p459 = scmp.lt.s32.totalorder %s26, 0
          %s460 = scalar_select %p459, %s26, 0
          %s461 = smul.addr %s460, 4
          %s462 = scalar_lea.vmem %s4, %s461
        $region68: #{tpu_custom_call.1} parent=31 // pred_fallthru
          _
        // Predicated region
        $region69: #{tpu_custom_call.1} parent=31 // pred_check
          %p463 = pneg %p192
        $region70: #{tpu_custom_call.1} parent=31 // pred_check_branch
          %465 = sbr.rel (%p463) target = $region72
        $region71: #{tpu_custom_call.1} parent=31 // pred_region
          %p466 = scmp.lt.s32.totalorder %s26, 0
          %s467 = scalar_select %p466, %s26, 0
          %s468 = smul.addr %s467, 4
          %s469 = scalar_lea.vmem %s5, %s468
        $region72: #{tpu_custom_call.1} parent=31 // pred_fallthru
          _
        // Predicated region
        $region73: #{tpu_custom_call.1} parent=31 // pred_check
          %p470 = pneg %p218
        $region74: #{tpu_custom_call.1} parent=31 // pred_check_branch
          %472 = sbr.rel (%p470) target = $region76
        $region75: #{tpu_custom_call.1} parent=31 // pred_region
          %p473 = scmp.lt.s32.totalorder %s26, 0
          %s474 = scalar_select %p473, %s26, 0
          %s475 = smul.addr %s474, 4
          %s476 = scalar_lea.vmem %s6, %s475
        $region76: #{tpu_custom_call.1} parent=31 // pred_fallthru
          _
      $region32: #{tpu_custom_call.1} parent=5 // pred_fallthru
        _
      %p477 = scmp.le.s32.totalorder 2, %s16
      // Predicated region
      $region77: #{tpu_custom_call.1} parent=5 // pred_check
        %p478 = pneg %p477
      $region78: #{tpu_custom_call.1} parent=5 // pred_check_branch
        %480 = sbr.rel (%p478) target = $region80
      $region79: #{tpu_custom_call.1} parent=5 // pred_region
        %s481 = ssub.s32 %s16, 2
      $region80: #{tpu_custom_call.1} parent=5 // pred_fallthru
        _
    $region6: #{tpu_custom_call.1} parent=1 // loop_footer
      %s20 = sadd.s32 1, %s16
    $region7: #{tpu_custom_call.1} parent=1 // loop_footer_branch
      %15 = sbr.rel target = $region3
    $region8: #{tpu_custom_call.1} parent=1 // loop_exit
      _
    %482 = vsyncpa [#allocation5], 1
    %s483 = scalar_lea.sflag [#allocation5], 1
    %484 = vsyncpa %s483, 1

</llo_original>
